<compile_context>
chip_gen: v6e
topology: v6e:2x2x1
jax: 0.10.0
libtpu: 0.0.40
codegen_flags: <defaults>
</compile_context>

<pallas_src>
import jax
import jax.numpy as jnp
from jax import lax
from jax.experimental import pallas as pl
from jax.experimental.pallas import tpu as pltpu


def _round_up(x, m):
    return ((x + m - 1) // m) * m


def _conv_block_kernel(p_ref, w_ref, b_ref, scale_ref, shift_ref, o_ref):
    # p_ref:     (TM, Kp)  patches tile          (streamed)
    # w_ref:     (Kp, OC)  conv weight           (VMEM-resident)
    # b_ref:     (1,  OC)  conv bias             (VMEM-resident)
    # scale_ref: (1,  OC)  BN scale = gamma/sqrt(var+eps)
    # shift_ref: (1,  OC)  BN shift = beta - mean*scale
    # o_ref:     (TM, OC)
    acc = jnp.dot(p_ref[...], w_ref[...], preferred_element_type=jnp.float32)
    y = jnp.maximum(acc + b_ref[...], 0.0)                      # bias + ReLU
    o_ref[...] = (y * scale_ref[...] + shift_ref[...]).astype(o_ref.dtype)  # BN affine


def _pick_row_tile(m, kp, oc, dtype_bytes=4,
                   budget_bytes=12 * 1024 * 1024, cap=2048):
    """Largest M-tile (multiple of 8) whose double-buffered working set fits a
    VMEM budget that is safe on every generation (v5e 16 MiB scoped default,
    v7x 64 MiB physical)."""
    resident = 2 * (kp * oc + 3 * oc) * dtype_bytes      # weight + bias/scale/shift
    per_row = 2 * (kp + oc) * dtype_bytes                # double-buffered in + out
    tm = (budget_bytes - resident) // per_row
    tm = max(8, (tm // 8) * 8)
    tm = min(tm, cap, _round_up(m, 8))
    return tm


def _im2col(x, kh, kw, stride, pad):
    """(N, C, H, W) -> (N*OH*OW, C*kh*kw) patches.

    Flat K ordering is c*KH*KW + i*KW + j, matching weight.reshape(OC, IC*KH*KW).
    """
    n, c, h, w = x.shape
    oh = (h + 2 * pad - kh) // stride + 1
    ow = (w + 2 * pad - kw) // stride + 1
    xp = jnp.pad(x, ((0, 0), (0, 0), (pad, pad), (pad, pad)))
    cols = []
    for i in range(kh):
        for j in range(kw):
            cols.append(xp[:, :, i:i + stride * oh:stride, j:j + stride * ow:stride])
    cols = jnp.stack(cols, axis=0)            # (kh*kw, N, C, OH, OW)
    cols = cols.transpose(1, 3, 4, 2, 0)      # (N, OH, OW, C, kh*kw)
    return cols.reshape(n * oh * ow, c * kh * kw), oh, ow


def conv_relu_bn(x, weight, bias, bn_scale, bn_shift, *, stride, pad):
    """One `conv()` block: Conv2d -> ReLU -> BatchNorm2d (eval-mode affine)."""
    n, c, h, w = x.shape
    oc, ic, kh, kw = weight.shape
    assert ic == c

    patches, oh, ow = _im2col(x, kh, kw, stride, pad)
    m, k = patches.shape

    # Lane-dense contraction dim: pad K up to a multiple of 128 with zeros.
    kp = _round_up(k, 128)
    if kp != k:
        patches = jnp.pad(patches, ((0, 0), (0, kp - k)))
    w2 = weight.reshape(oc, ic * kh * kw).T.astype(jnp.float32)  # (K, OC)
    if kp != k:
        w2 = jnp.pad(w2, ((0, kp - k), (0, 0)))

    # VMEM-budgeted M tiling; pad M so the tile divides it evenly.
    tm = _pick_row_tile(m, kp, oc)
    m_pad = _round_up(m, tm)
    if m_pad != m:
        patches = jnp.pad(patches, ((0, m_pad - m), (0, 0)))

    b2 = bias.reshape(1, oc).astype(jnp.float32)
    s2 = bn_scale.reshape(1, oc).astype(jnp.float32)
    t2 = bn_shift.reshape(1, oc).astype(jnp.float32)

    out2 = pl.pallas_call(
        _conv_block_kernel,
        out_shape=jax.ShapeDtypeStruct((m_pad, oc), jnp.float32),
        grid_spec=pltpu.PrefetchScalarGridSpec(
            num_scalar_prefetch=0,
            grid=(m_pad // tm,),
            in_specs=[
                pl.BlockSpec((tm, kp), lambda i: (i, 0)),   # patches (streamed)
                pl.BlockSpec((kp, oc), lambda i: (0, 0)),   # weight (resident)
                pl.BlockSpec((1, oc), lambda i: (0, 0)),    # conv bias (resident)
                pl.BlockSpec((1, oc), lambda i: (0, 0)),    # BN scale (resident)
                pl.BlockSpec((1, oc), lambda i: (0, 0)),    # BN shift (resident)
            ],
            out_specs=pl.BlockSpec((tm, oc), lambda i: (i, 0)),
        ),
        compiler_params=pltpu.CompilerParams(
            dimension_semantics=("parallel",),
        ),
    )(patches.astype(jnp.float32), w2, b2, s2, t2)

    out2 = out2[:m]                                              # drop M padding
    return out2.reshape(n, oh, ow, oc).transpose(0, 3, 1, 2)     # back to NCHW


_LAYER_CFGS = [
    (3, 128, 5, 2, 2),
    (128, 128, 3, 2, 1),
    (128, 128, 3, 2, 1),
    (128, 128, 3, 1, 1),
    (128, 128, 3, 1, 1),
]


def init_feature_extractor_params(key):
    params = []
    eps = 1e-5
    for (ic, oc, k, s, p) in _LAYER_CFGS:
        key, kw_, kb_, kg_, kbe_, km_, kv_ = jax.random.split(key, 7)
        fan_in = ic * k * k
        w = jax.random.normal(kw_, (oc, ic, k, k), jnp.float32) / jnp.sqrt(fan_in)
        b = 0.1 * jax.random.normal(kb_, (oc,), jnp.float32)
        gamma = 1.0 + 0.1 * jax.random.normal(kg_, (oc,), jnp.float32)
        beta = 0.1 * jax.random.normal(kbe_, (oc,), jnp.float32)
        mean = 0.1 * jax.random.normal(km_, (oc,), jnp.float32)
        var = jax.random.uniform(kv_, (oc,), jnp.float32, minval=0.5, maxval=1.5)
        scale = gamma / jnp.sqrt(var + eps)
        shift = beta - mean * scale
        params.append(dict(w=w, b=b, scale=scale, shift=shift, stride=s, pad=p))
    return params


def feature_extractor(x, params):
    for p in params:
        x = conv_relu_bn(x, p["w"], p["b"], p["scale"], p["shift"],
                         stride=p["stride"], pad=p["pad"])
    return x


def feature_extractor_ref(x, params):
    """Pure-JAX reference with identical (eval-mode BN) semantics."""
    for p in params:
        y = lax.conv_general_dilated(
            x, p["w"],
            window_strides=(p["stride"], p["stride"]),
            padding=[(p["pad"], p["pad"]), (p["pad"], p["pad"])],
            dimension_numbers=("NCHW", "OIHW", "NCHW"),
            precision=lax.Precision.HIGHEST)
        y = jnp.maximum(y + p["b"][None, :, None, None], 0.0)
        x = y * p["scale"][None, :, None, None] + p["shift"][None, :, None, None]
    return x


if __name__ == "__main__":
    key = jax.random.PRNGKey(0)
    kparams, kx = jax.random.split(key)
    params = init_feature_extractor_params(kparams)

    # Small but representative: batch=2, 3 input channels, 16x16 spatial.
    x = jax.random.normal(kx, (2, 3, 16, 16), dtype=jnp.float32)

    out = feature_extractor(x, params)
    out = jax.block_until_ready(out)

    ref = feature_extractor_ref(x, params)
    assert out.shape == ref.shape == (2, 128, 2, 2), out.shape
    assert jnp.allclose(out, ref, atol=2e-2, rtol=2e-2), \
        float(jnp.max(jnp.abs(out - ref)))

    print("KERNEL_OK")
</pallas_src>

<mosaic_0001>
module attributes {stable_mosaic.version = 11 : i64} {
  func.func @_conv_block_kernel(%arg0: i32, %arg1: memref<128x128xf32, #tpu.memory_space<vmem>>, %arg2: memref<128x128xf32, #tpu.memory_space<vmem>>, %arg3: memref<1x128xf32, #tpu.memory_space<vmem>>, %arg4: memref<1x128xf32, #tpu.memory_space<vmem>>, %arg5: memref<1x128xf32, #tpu.memory_space<vmem>>, %arg6: memref<128x128xf32, #tpu.memory_space<vmem>>) attributes {dimension_semantics = [#tpu.dimension_semantics<parallel>], iteration_bounds = array<i64: 1>, scalar_prefetch = 0 : i64, scratch_operands = 0 : i64, tpu.core_type = #tpu.core_type<tc>, window_params = [{transform_indices = @transform_0, window_bounds = array<i64: 128, 128>}, {pipeline_mode = #tpu.pipeline_mode<synchronous>, transform_indices = @transform_1, window_bounds = array<i64: 128, 128>}, {pipeline_mode = #tpu.pipeline_mode<synchronous>, transform_indices = @transform_2, window_bounds = array<i64: 1, 128>}, {pipeline_mode = #tpu.pipeline_mode<synchronous>, transform_indices = @transform_3, window_bounds = array<i64: 1, 128>}, {pipeline_mode = #tpu.pipeline_mode<synchronous>, transform_indices = @transform_4, window_bounds = array<i64: 1, 128>}, {transform_indices = @transform_5, window_bounds = array<i64: 128, 128>}]} {
    %c0 = arith.constant 0 : index
    %c0_0 = arith.constant 0 : index
    %0 = vector.load %arg1[%c0, %c0_0] : memref<128x128xf32, #tpu.memory_space<vmem>>, vector<128x128xf32>
    %c0_1 = arith.constant 0 : index
    %c0_2 = arith.constant 0 : index
    %1 = vector.load %arg2[%c0_1, %c0_2] : memref<128x128xf32, #tpu.memory_space<vmem>>, vector<128x128xf32>
    %cst = arith.constant dense<0.000000e+00> : vector<128x128xf32>
    %2 = tpu.matmul %0, %1, %cst {dimension_numbers = #tpu.dot_dimension_numbers<[1], [0], [0], [1], [0, 0, 1, 1], [], []>} : vector<128x128xf32>, vector<128x128xf32>, vector<128x128xf32> -> vector<128x128xf32>
    %c0_3 = arith.constant 0 : index
    %c0_4 = arith.constant 0 : index
    %3 = vector.load %arg3[%c0_3, %c0_4] : memref<1x128xf32, #tpu.memory_space<vmem>>, vector<1x128xf32>
    %4 = vector.broadcast %3 : vector<1x128xf32> to vector<128x128xf32>
    %5 = arith.addf %2, %4 : vector<128x128xf32>
    %cst_5 = arith.constant 0.000000e+00 : f32
    %6 = vector.broadcast %cst_5 : f32 to vector<128x128xf32>
    %7 = arith.maximumf %5, %6 : vector<128x128xf32>
    %c0_6 = arith.constant 0 : index
    %c0_7 = arith.constant 0 : index
    %8 = vector.load %arg4[%c0_6, %c0_7] : memref<1x128xf32, #tpu.memory_space<vmem>>, vector<1x128xf32>
    %9 = vector.broadcast %8 : vector<1x128xf32> to vector<128x128xf32>
    %10 = arith.mulf %7, %9 : vector<128x128xf32>
    %c0_8 = arith.constant 0 : index
    %c0_9 = arith.constant 0 : index
    %11 = vector.load %arg5[%c0_8, %c0_9] : memref<1x128xf32, #tpu.memory_space<vmem>>, vector<1x128xf32>
    %12 = vector.broadcast %11 : vector<1x128xf32> to vector<128x128xf32>
    %13 = arith.addf %10, %12 : vector<128x128xf32>
    %c0_10 = arith.constant 0 : index
    %c0_11 = arith.constant 0 : index
    %14 = vector.load %arg6[%c0_10, %c0_11] : memref<128x128xf32, #tpu.memory_space<vmem>>, vector<128x128xf32>
    tpu.vector_store %arg6[%c0_10, %c0_11], %13 {strides = array<i32>} : memref<128x128xf32, #tpu.memory_space<vmem>>, vector<128x128xf32>,
    return
  }
  func.func @transform_0(%arg0: i32) -> (i32, i32) {
    %c0_i32 = arith.constant 0 : i32
    %c0_i32_0 = arith.constant 0 : i32
    return %arg0, %c0_i32 : i32, i32
  }
  func.func @transform_1(%arg0: i32) -> (i32, i32) {
    %c0_i32 = arith.constant 0 : i32
    %c0_i32_0 = arith.constant 0 : i32
    %c0_i32_1 = arith.constant 0 : i32
    return %c0_i32, %c0_i32_0 : i32, i32
  }
  func.func @transform_2(%arg0: i32) -> (i32, i32) {
    %c0_i32 = arith.constant 0 : i32
    %c0_i32_0 = arith.constant 0 : i32
    %c0_i32_1 = arith.constant 0 : i32
    return %c0_i32, %c0_i32_0 : i32, i32
  }
  func.func @transform_3(%arg0: i32) -> (i32, i32) {
    %c0_i32 = arith.constant 0 : i32
    %c0_i32_0 = arith.constant 0 : i32
    %c0_i32_1 = arith.constant 0 : i32
    return %c0_i32, %c0_i32_0 : i32, i32
  }
  func.func @transform_4(%arg0: i32) -> (i32, i32) {
    %c0_i32 = arith.constant 0 : i32
    %c0_i32_0 = arith.constant 0 : i32
    %c0_i32_1 = arith.constant 0 : i32
    return %c0_i32, %c0_i32_0 : i32, i32
  }
  func.func @transform_5(%arg0: i32) -> (i32, i32) {
    %c0_i32 = arith.constant 0 : i32
    %c0_i32_0 = arith.constant 0 : i32
    return %arg0, %c0_i32 : i32, i32
  }
}

</mosaic_0001>

<llo_original>
// kernel: tpu_custom_call.1
$region0: #{tpu_custom_call.1}
  #allocation0 [shape = 'u32[]', space=smem, size = 0x4, offset = 0x4, fixed_abs, tag = 'smem constant byte address 0x4 - core index']
  #allocation1 [shape = 'u32[144,128]{1,0:T(1,128)}', space=vmem, size = 0x12000, scoped, tag = 'internal scratch']
  %s0 = inlined_call_operand.hbm [shape: f32[128,128], index: 0, kind: input, shape index: {}]
  %s1 = inlined_call_operand.hbm [shape: f32[128,128], index: 1, kind: input, shape index: {}]
  %s2 = inlined_call_operand.vmem [shape: f32[1,128], index: 2, kind: input, shape index: {}]
  %s3 = inlined_call_operand.vmem [shape: f32[1,128], index: 3, kind: input, shape index: {}]
  %s4 = inlined_call_operand.vmem [shape: f32[1,128], index: 4, kind: input, shape index: {}]
  %s5 = inlined_call_operand.hbm [shape: f32[128,128], index: 5, kind: output, shape index: {}]
  %s6 = sld [smem:[#allocation0]]
  $region38: #{tpu_custom_call.1} parent=0
    _
  %s8 = ssub.s32 1, %s6
  %s9 = scalar_select 0, %s8, %s6
  $region1: #{tpu_custom_call.1} parent=0
    #allocation2 [shape = 'u8[65536]{0}', space=vmem, size = 0x10000, scoped, tag = 'input window, operand 0, single buffered']
    #allocation3 [shape = 's32[1]{0}', space=sflag, size = 0x4, scoped, tag = 'scoped memory for tpu_custom_call.1']
    #allocation4 [shape = 's32[1]{0}', space=sflag, size = 0x4, scoped, tag = 'scoped memory for tpu_custom_call.1']
    #allocation5 [shape = 'u8[65536]{0}', space=vmem, size = 0x10000, scoped, tag = 'input window, operand 1, single buffered']
    #allocation6 [shape = 's32[1]{0}', space=sflag, size = 0x4, scoped, tag = 'scoped memory for tpu_custom_call.1']
    #allocation7 [shape = 'u8[65536]{0}', space=vmem, size = 0x10000, scoped, tag = 'output window, operand 0, single buffered']
    %10 = vsyncpa [#allocation3], 0
    %11 = vsyncpa [#allocation6], 0
    %12 = vsyncpa [#allocation4], 0
    // Predicated region
    $region2: #{tpu_custom_call.1} parent=1 // pred_check
      _
    $region3: #{tpu_custom_call.1} parent=1 // pred_check_branch
      %14 = sbr.rel (0) target = $region5
    $region4: #{tpu_custom_call.1} parent=1 // pred_region
      %s16 = ssub.s32 2048, 2048
      %17 = vsyncadd [#allocation3], %s16
      %s18 = sshll.u32 [#allocation2], 4
      %s19 = int_to_ptr.vmem [resolvable:$true] %s18
      %24 = dma.hbm_to_vmem [thread:$0]  %s0, 2048, %s19, [#allocation3], 128, 128, 8
    $region5: #{tpu_custom_call.1} parent=1 // pred_fallthru
      _
    // Predicated region
    $region6: #{tpu_custom_call.1} parent=1 // pred_check
      _
    $region7: #{tpu_custom_call.1} parent=1 // pred_check_branch
      %26 = sbr.rel (0) target = $region9
    $region8: #{tpu_custom_call.1} parent=1 // pred_region
      %s28 = ssub.s32 2048, 2048
      %29 = vsyncadd [#allocation6], %s28
      %s30 = sshll.u32 [#allocation5], 4
      %s31 = int_to_ptr.vmem [resolvable:$true] %s30
      %36 = dma.hbm_to_vmem [thread:$0]  %s1, 2048, %s31, [#allocation6], 128, 128, 8
    $region9: #{tpu_custom_call.1} parent=1 // pred_fallthru
      _
    // Predicated region
    $region10: #{tpu_custom_call.1} parent=1 // pred_check
      _
    $region11: #{tpu_custom_call.1} parent=1 // pred_check_branch
      %38 = sbr.rel (0) target = $region13
    $region12: #{tpu_custom_call.1} parent=1 // pred_region
      _
    $region13: #{tpu_custom_call.1} parent=1 // pred_fallthru
      _
    // Predicated region
    $region14: #{tpu_custom_call.1} parent=1 // pred_check
      _
    $region15: #{tpu_custom_call.1} parent=1 // pred_check_branch
      %40 = sbr.rel (0) target = $region17
    $region16: #{tpu_custom_call.1} parent=1 // pred_region
      _
    $region17: #{tpu_custom_call.1} parent=1 // pred_fallthru
      _
    // Predicated region
    $region18: #{tpu_custom_call.1} parent=1 // pred_check
      _
    $region19: #{tpu_custom_call.1} parent=1 // pred_check_branch
      %42 = sbr.rel (0) target = $region21
    $region20: #{tpu_custom_call.1} parent=1 // pred_region
      _
    $region21: #{tpu_custom_call.1} parent=1 // pred_fallthru
      _
    // Predicated region
    $region22: #{tpu_custom_call.1} parent=1 // pred_check
      _
    $region23: #{tpu_custom_call.1} parent=1 // pred_check_branch
      %44 = sbr.rel (0) target = $region25
    $region24: #{tpu_custom_call.1} parent=1 // pred_region
      %45 = dma.done [#allocation3], 2048
    $region25: #{tpu_custom_call.1} parent=1 // pred_fallthru
      _
    // Predicated region
    $region26: #{tpu_custom_call.1} parent=1 // pred_check
      _
    $region27: #{tpu_custom_call.1} parent=1 // pred_check_branch
      %47 = sbr.rel (0) target = $region29
    $region28: #{tpu_custom_call.1} parent=1 // pred_region
      %48 = dma.done [#allocation6], 2048
    $region29: #{tpu_custom_call.1} parent=1 // pred_fallthru
      _
    %v49 = vld [vmem:[#allocation2] sm:$0xff]
    %v50 = vld [vmem:[#allocation2 + $0x8] sm:$0xff]
    %v51 = vld [vmem:[#allocation2 + $0x10] sm:$0xff]
    %v52 = vld [vmem:[#allocation2 + $0x18] sm:$0xff]
    %v53 = vld [vmem:[#allocation2 + $0x20] sm:$0xff]
    %v54 = vld [vmem:[#allocation2 + $0x28] sm:$0xff]
    %v55 = vld [vmem:[#allocation2 + $0x30] sm:$0xff]
    %v56 = vld [vmem:[#allocation2 + $0x38] sm:$0xff]
    %v57 = vld [vmem:[#allocation2 + $0x40] sm:$0xff]
    %v58 = vld [vmem:[#allocation2 + $0x48] sm:$0xff]
    %v59 = vld [vmem:[#allocation2 + $0x50] sm:$0xff]
    %v60 = vld [vmem:[#allocation2 + $0x58] sm:$0xff]
    %v61 = vld [vmem:[#allocation2 + $0x60] sm:$0xff]
    %v62 = vld [vmem:[#allocation2 + $0x68] sm:$0xff]
    %v63 = vld [vmem:[#allocation2 + $0x70] sm:$0xff]
    %v64 = vld [vmem:[#allocation2 + $0x78] sm:$0xff]
    %v65 = vld [vmem:[#allocation5] sm:$0xff]
    %v66 = vld [vmem:[#allocation5 + $0x8] sm:$0xff]
    %v67 = vld [vmem:[#allocation5 + $0x10] sm:$0xff]
    %v68 = vld [vmem:[#allocation5 + $0x18] sm:$0xff]
    %v69 = vld [vmem:[#allocation5 + $0x20] sm:$0xff]
    %v70 = vld [vmem:[#allocation5 + $0x28] sm:$0xff]
    %v71 = vld [vmem:[#allocation5 + $0x30] sm:$0xff]
    %v72 = vld [vmem:[#allocation5 + $0x38] sm:$0xff]
    %v73 = vld [vmem:[#allocation5 + $0x40] sm:$0xff]
    %v74 = vld [vmem:[#allocation5 + $0x48] sm:$0xff]
    %v75 = vld [vmem:[#allocation5 + $0x50] sm:$0xff]
    %v76 = vld [vmem:[#allocation5 + $0x58] sm:$0xff]
    %v77 = vld [vmem:[#allocation5 + $0x60] sm:$0xff]
    %v78 = vld [vmem:[#allocation5 + $0x68] sm:$0xff]
    %v79 = vld [vmem:[#allocation5 + $0x70] sm:$0xff]
    %v80 = vld [vmem:[#allocation5 + $0x78] sm:$0xff]
    %v81 = vld [vmem:[%s2] sm:$0x1]
    %v83 = vlaneseq
    %v84 = vshrl.u32 %v83, 7
    %v85 = vsub.s32 0, %v84
    %v86 = vrot.slane %v81, %v85
    %88 = vmatprep.subr.mxu0 0.0
    %89 = vmatpush1.msra.mxu0 %v80
    %90 = vmatprep.subr.mxu0 0.0
    %91 = vmatpush1.msra.mxu0 %v79
    %92 = vmatprep.subr.mxu0 0.0
    %93 = vmatpush1.msra.mxu0 %v78
    %94 = vmatprep.subr.mxu0 0.0
    %95 = vmatpush1.msra.mxu0 %v77
    %96 = vmatprep.subr.mxu0 0.0
    %97 = vmatpush1.msra.mxu0 %v76
    %98 = vmatprep.subr.mxu0 0.0
    %99 = vmatpush1.msra.mxu0 %v75
    %100 = vmatprep.subr.mxu0 0.0
    %101 = vmatpush1.msra.mxu0 %v74
    %102 = vmatprep.subr.mxu0 0.0
    %103 = vmatpush1.msra.mxu0 %v73
    %104 = vmatprep.subr.mxu0 0.0
    %105 = vmatpush1.msra.mxu0 %v72
    %106 = vmatprep.subr.mxu0 0.0
    %107 = vmatpush1.msra.mxu0 %v71
    %108 = vmatprep.subr.mxu0 0.0
    %109 = vmatpush1.msra.mxu0 %v70
    %110 = vmatprep.subr.mxu0 0.0
    %111 = vmatpush1.msra.mxu0 %v69
    %112 = vmatprep.subr.mxu0 0.0
    %113 = vmatpush1.msra.mxu0 %v68
    %114 = vmatprep.subr.mxu0 0.0
    %115 = vmatpush1.msra.mxu0 %v67
    %116 = vmatprep.subr.mxu0 0.0
    %117 = vmatpush1.msra.mxu0 %v66
    %118 = vmatprep.subr.mxu0 0.0
    %119 = vmatpush1.msra.mxu0 %v65
    %120 = vmatprep.subr.mxu0 0.0
    %121 = vmatpush2.msra.mxu0 0.0
    %122 = vmatprep.subr.mxu0 0.0
    %123 = vmatpush2.msra.mxu0 0.0
    %124 = vmatprep.subr.mxu0 0.0
    %125 = vmatpush2.msra.mxu0 0.0
    %126 = vmatprep.subr.mxu0 0.0
    %127 = vmatpush2.msra.mxu0 0.0
    %128 = vmatprep.subr.mxu0 0.0
    %129 = vmatpush2.msra.mxu0 0.0
    %130 = vmatprep.subr.mxu0 0.0
    %131 = vmatpush2.msra.mxu0 0.0
    %132 = vmatprep.subr.mxu0 0.0
    %133 = vmatpush2.msra.mxu0 0.0
    %134 = vmatprep.subr.mxu0 0.0
    %135 = vmatpush2.msra.mxu0 0.0
    %136 = vmatprep.subr.mxu0 0.0
    %137 = vmatpush2.msra.mxu0 0.0
    %138 = vmatprep.subr.mxu0 0.0
    %139 = vmatpush2.msra.mxu0 0.0
    %140 = vmatprep.subr.mxu0 0.0
    %141 = vmatpush2.msra.mxu0 0.0
    %142 = vmatprep.subr.mxu0 0.0
    %143 = vmatpush2.msra.mxu0 0.0
    %144 = vmatprep.subr.mxu0 0.0
    %145 = vmatpush2.msra.mxu0 0.0
    %146 = vmatprep.subr.mxu0 0.0
    %147 = vmatpush2.msra.mxu0 0.0
    %148 = vmatprep.subr.mxu0 0.0
    %149 = vmatpush2.msra.mxu0 0.0
    %150 = vmatprep.subr.mxu0 0.0
    %151 = vmatpush2.msra.mxu0 0.0
    %152 = vmatprep.mubr.f32.mxu0 0.0
    %153 = vmatmul.mubr.f32.gmra.mxu0 %v49
    %v154 = vpop.f32.mrf.mxu0
    %v155 = vadd.f32 %v86, %v154
    %v156 = vpop.f32.mrf.mxu0
    %157 = vmatprep.mubr.f32.mxu0 0.0
    %158 = vmatmul.mubr.f32.gmra.mxu0 %v50
    %v159 = vpop.f32.mrf.mxu0
    %v160 = vadd.f32 %v86, %v159
    %v161 = vpop.f32.mrf.mxu0
    %162 = vmatprep.mubr.f32.mxu0 0.0
    %163 = vmatmul.mubr.f32.gmra.mxu0 %v51
    %v164 = vpop.f32.mrf.mxu0
    %v165 = vadd.f32 %v86, %v164
    %v166 = vpop.f32.mrf.mxu0
    %167 = vmatprep.mubr.f32.mxu0 0.0
    %168 = vmatmul.mubr.f32.gmra.mxu0 %v52
    %v169 = vpop.f32.mrf.mxu0
    %v170 = vadd.f32 %v86, %v169
    %v171 = vpop.f32.mrf.mxu0
    %172 = vmatprep.mubr.f32.mxu0 0.0
    %173 = vmatmul.mubr.f32.gmra.mxu0 %v53
    %v174 = vpop.f32.mrf.mxu0
    %v175 = vadd.f32 %v86, %v174
    %v176 = vpop.f32.mrf.mxu0
    %177 = vmatprep.mubr.f32.mxu0 0.0
    %178 = vmatmul.mubr.f32.gmra.mxu0 %v54
    %v179 = vpop.f32.mrf.mxu0
    %v180 = vadd.f32 %v86, %v179
    %v181 = vpop.f32.mrf.mxu0
    %182 = vmatprep.mubr.f32.mxu0 0.0
    %183 = vmatmul.mubr.f32.gmra.mxu0 %v55
    %v184 = vpop.f32.mrf.mxu0
    %v185 = vadd.f32 %v86, %v184
    %v186 = vpop.f32.mrf.mxu0
    %187 = vmatprep.mubr.f32.mxu0 0.0
    %188 = vmatmul.mubr.f32.gmra.mxu0 %v56
    %v189 = vpop.f32.mrf.mxu0
    %v190 = vadd.f32 %v86, %v189
    %v191 = vpop.f32.mrf.mxu0
    %192 = vmatprep.mubr.f32.mxu0 0.0
    %193 = vmatmul.mubr.f32.gmra.mxu0 %v57
    %v194 = vpop.f32.mrf.mxu0
    %v195 = vadd.f32 %v86, %v194
    %v196 = vpop.f32.mrf.mxu0
    %197 = vmatprep.mubr.f32.mxu0 0.0
    %198 = vmatmul.mubr.f32.gmra.mxu0 %v58
    %v199 = vpop.f32.mrf.mxu0
    %v200 = vadd.f32 %v86, %v199
    %v201 = vpop.f32.mrf.mxu0
    %202 = vmatprep.mubr.f32.mxu0 0.0
    %203 = vmatmul.mubr.f32.gmra.mxu0 %v59
    %v204 = vpop.f32.mrf.mxu0
    %v205 = vadd.f32 %v86, %v204
    %v206 = vpop.f32.mrf.mxu0
    %207 = vmatprep.mubr.f32.mxu0 0.0
    %208 = vmatmul.mubr.f32.gmra.mxu0 %v60
    %v209 = vpop.f32.mrf.mxu0
    %v210 = vadd.f32 %v86, %v209
    %v211 = vpop.f32.mrf.mxu0
    %212 = vmatprep.mubr.f32.mxu0 0.0
    %213 = vmatmul.mubr.f32.gmra.mxu0 %v61
    %v214 = vpop.f32.mrf.mxu0
    %v215 = vadd.f32 %v86, %v214
    %v216 = vpop.f32.mrf.mxu0
    %217 = vmatprep.mubr.f32.mxu0 0.0
    %218 = vmatmul.mubr.f32.gmra.mxu0 %v62
    %v219 = vpop.f32.mrf.mxu0
    %v220 = vadd.f32 %v86, %v219
    %v221 = vpop.f32.mrf.mxu0
    %222 = vmatprep.mubr.f32.mxu0 0.0
    %223 = vmatmul.mubr.f32.gmra.mxu0 %v63
    %v224 = vpop.f32.mrf.mxu0
    %v225 = vadd.f32 %v86, %v224
    %v226 = vpop.f32.mrf.mxu0
    %227 = vmatprep.mubr.f32.mxu0 0.0
    %228 = vmatmul.mubr.f32.gmra.mxu0 %v64
    %v229 = vpop.f32.mrf.mxu0
    %v230 = vadd.f32 %v86, %v229
    %v231 = vpop.f32.mrf.mxu0
    %232 = vdwg.mxu0
    %v233 = vmax.f32 %v155, 0.0
    %v234 = vmax.f32 %v160, 0.0
    %v235 = vmax.f32 %v165, 0.0
    %v236 = vmax.f32 %v170, 0.0
    %v237 = vmax.f32 %v175, 0.0
    %v238 = vmax.f32 %v180, 0.0
    %v239 = vmax.f32 %v185, 0.0
    %v240 = vmax.f32 %v190, 0.0
    %v241 = vmax.f32 %v195, 0.0
    %v242 = vmax.f32 %v200, 0.0
    %v243 = vmax.f32 %v205, 0.0
    %v244 = vmax.f32 %v210, 0.0
    %v245 = vmax.f32 %v215, 0.0
    %v246 = vmax.f32 %v220, 0.0
    %v247 = vmax.f32 %v225, 0.0
    %v248 = vmax.f32 %v230, 0.0
    %v249 = vld [vmem:[%s3] sm:$0x1]
    %v251 = vlaneseq
    %v252 = vshrl.u32 %v251, 7
    %v253 = vsub.s32 0, %v252
    %v254 = vrot.slane %v249, %v253
    %v256 = vmul.f32 %v233, %v254
    %v257 = vmul.f32 %v234, %v254
    %v258 = vmul.f32 %v235, %v254
    %v259 = vmul.f32 %v236, %v254
    %v260 = vmul.f32 %v237, %v254
    %v261 = vmul.f32 %v238, %v254
    %v262 = vmul.f32 %v239, %v254
    %v263 = vmul.f32 %v240, %v254
    %v264 = vmul.f32 %v241, %v254
    %v265 = vmul.f32 %v242, %v254
    %v266 = vmul.f32 %v243, %v254
    %v267 = vmul.f32 %v244, %v254
    %v268 = vmul.f32 %v245, %v254
    %v269 = vmul.f32 %v246, %v254
    %v270 = vmul.f32 %v247, %v254
    %v271 = vmul.f32 %v248, %v254
    %v272 = vld [vmem:[%s4] sm:$0x1]
    %v274 = vlaneseq
    %v275 = vshrl.u32 %v274, 7
    %v276 = vsub.s32 0, %v275
    %v277 = vrot.slane %v272, %v276
    %v279 = vadd.f32 %v256, %v277
    %v280 = vadd.f32 %v257, %v277
    %v281 = vadd.f32 %v258, %v277
    %v282 = vadd.f32 %v259, %v277
    %v283 = vadd.f32 %v260, %v277
    %v284 = vadd.f32 %v261, %v277
    %v285 = vadd.f32 %v262, %v277
    %v286 = vadd.f32 %v263, %v277
    %v287 = vadd.f32 %v264, %v277
    %v288 = vadd.f32 %v265, %v277
    %v289 = vadd.f32 %v266, %v277
    %v290 = vadd.f32 %v267, %v277
    %v291 = vadd.f32 %v268, %v277
    %v292 = vadd.f32 %v269, %v277
    %v293 = vadd.f32 %v270, %v277
    %v294 = vadd.f32 %v271, %v277
    %295 = vst [vmem:[#allocation7] sm:$0xff] %v279
    %296 = vst [vmem:[#allocation7 + $0x8] sm:$0xff] %v280
    %297 = vst [vmem:[#allocation7 + $0x10] sm:$0xff] %v281
    %298 = vst [vmem:[#allocation7 + $0x18] sm:$0xff] %v282
    %299 = vst [vmem:[#allocation7 + $0x20] sm:$0xff] %v283
    %300 = vst [vmem:[#allocation7 + $0x28] sm:$0xff] %v284
    %301 = vst [vmem:[#allocation7 + $0x30] sm:$0xff] %v285
    %302 = vst [vmem:[#allocation7 + $0x38] sm:$0xff] %v286
    %303 = vst [vmem:[#allocation7 + $0x40] sm:$0xff] %v287
    %304 = vst [vmem:[#allocation7 + $0x48] sm:$0xff] %v288
    %305 = vst [vmem:[#allocation7 + $0x50] sm:$0xff] %v289
    %306 = vst [vmem:[#allocation7 + $0x58] sm:$0xff] %v290
    %307 = vst [vmem:[#allocation7 + $0x60] sm:$0xff] %v291
    %308 = vst [vmem:[#allocation7 + $0x68] sm:$0xff] %v292
    %309 = vst [vmem:[#allocation7 + $0x70] sm:$0xff] %v293
    %310 = vst [vmem:[#allocation7 + $0x78] sm:$0xff] %v294
    // Predicated region
    $region30: #{tpu_custom_call.1} parent=1 // pred_check
      _
    $region31: #{tpu_custom_call.1} parent=1 // pred_check_branch
      %312 = sbr.rel (0) target = $region33
    $region32: #{tpu_custom_call.1} parent=1 // pred_region
      %s314 = ssub.s32 2048, 2048
      %315 = vsyncadd [#allocation4], %s314
      %s316 = sshll.u32 [#allocation7], 4
      %s317 = int_to_ptr.vmem [resolvable:$true] %s316
      %322 = dma.vmem_to_hbm [thread:$0]  %s317, 2048, %s5, [#allocation4], 128, 128, 8
    $region33: #{tpu_custom_call.1} parent=1 // pred_fallthru
      _
    // Predicated region
    $region34: #{tpu_custom_call.1} parent=1 // pred_check
      _
    $region35: #{tpu_custom_call.1} parent=1 // pred_check_branch
      %324 = sbr.rel (0) target = $region37
    $region36: #{tpu_custom_call.1} parent=1 // pred_region
      %325 = dma.done [#allocation4], 2048
    $region37: #{tpu_custom_call.1} parent=1 // pred_fallthru
      _
    %326 = vsyncpa [#allocation3], 1
    %327 = vsyncpa [#allocation6], 1
    %328 = vsyncpa [#allocation4], 1

</llo_original>
